<compile_context>
chip_gen: v7x
topology: tpu7x:2x2x1
jax: 0.10.0
libtpu: 0.0.40
codegen_flags: <defaults>
</compile_context>

<pallas_src>
import math

import jax
import jax.numpy as jnp
from jax.experimental import pallas as pl
from jax.experimental.pallas import tpu as pltpu


def actor_kernel(x_ref, w1_ref, b1_ref, w2_ref, b2_ref, w3_ref, b3_ref, o_ref):
    x = x_ref[...]
    # Read each bias once per grid step (broadcast happens in the add).
    b1 = b1_ref[...]
    b2 = b2_ref[...]
    b3 = b3_ref[...]

    # fc1 + relu
    h1 = jnp.dot(x, w1_ref[...], preferred_element_type=jnp.float32) + b1
    h1 = jnp.maximum(h1, 0.0)
    # fc2 + relu
    h2 = jnp.dot(h1, w2_ref[...], preferred_element_type=jnp.float32) + b2
    h2 = jnp.maximum(h2, 0.0)
    # fc3 + tanh (lane-dense: w3/b3 are zero-padded to 128 output columns)
    out = jnp.dot(h2, w3_ref[...], preferred_element_type=jnp.float32) + b3
    o_ref[...] = jnp.tanh(out).astype(o_ref.dtype)


def _round_up(x, m):
    return ((x + m - 1) // m) * m


def actor_forward(state, w1, b1, w2, b2, w3, b3):
    """state: (B, state_size); returns (B, action_size)."""
    B, state_size = state.shape
    H1 = w1.shape[1]
    H2 = w2.shape[1]
    action_size = w3.shape[1]

    # Lane-dense padding of the awkward dims (K=state_size, N=action_size).
    K_PAD = _round_up(state_size, 128)
    N_PAD = _round_up(action_size, 128)

    # Batch tile: fill MXU rows when batch is large, else the (8-aligned) batch.
    TB = min(256, _round_up(B, 8))
    B_pad = _round_up(B, TB)

    f32 = jnp.float32
    x_p = jnp.zeros((B_pad, K_PAD), f32).at[:B, :state_size].set(state.astype(f32))
    w1_p = jnp.zeros((K_PAD, H1), f32).at[:state_size, :].set(w1)
    w3_p = jnp.zeros((H2, N_PAD), f32).at[:, :action_size].set(w3)
    b3_p = jnp.zeros((1, N_PAD), f32).at[:, :action_size].set(b3)

    grid = (B_pad // TB,)

    out = pl.pallas_call(
        actor_kernel,
        out_shape=jax.ShapeDtypeStruct((B_pad, N_PAD), f32),
        grid=grid,
        in_specs=[
            # Batch-tiled activations stream through VMEM.
            pl.BlockSpec((TB, K_PAD), lambda i: (i, 0)),
            # Weights / biases: constant block index -> VMEM-resident.
            pl.BlockSpec((K_PAD, H1), lambda i: (0, 0)),
            pl.BlockSpec((1, H1), lambda i: (0, 0)),
            pl.BlockSpec((H1, H2), lambda i: (0, 0)),
            pl.BlockSpec((1, H2), lambda i: (0, 0)),
            pl.BlockSpec((H2, N_PAD), lambda i: (0, 0)),
            pl.BlockSpec((1, N_PAD), lambda i: (0, 0)),
        ],
        out_specs=pl.BlockSpec((TB, N_PAD), lambda i: (i, 0)),
        compiler_params=pltpu.CompilerParams(
            dimension_semantics=("parallel",),
        ),
    )(x_p, w1_p, b1, w2, b2, w3_p, b3_p)

    # Slice off batch padding and the zero-padded action columns.
    return out[:B, :action_size]


def init_actor_params(key, state_size, action_size, fc1_units=256, fc2_units=256):
    """Deterministic init mirroring Actor.reset_parameters().

    Note: PyTorch's hidden_init uses weight.size()[0] == out_features, so the
    limit is 1/sqrt(out_features); we reproduce that quirk here.
    """
    k1, k2, k3, kb1, kb2, kb3 = jax.random.split(key, 6)

    lim1 = 1.0 / math.sqrt(fc1_units)
    lim2 = 1.0 / math.sqrt(fc2_units)
    lim3 = 0.003

    # Stored as (in, out) == transpose of the PyTorch (out, in) layout.
    w1 = jax.random.uniform(k1, (state_size, fc1_units), jnp.float32, -lim1, lim1)
    w2 = jax.random.uniform(k2, (fc1_units, fc2_units), jnp.float32, -lim2, lim2)
    w3 = jax.random.uniform(k3, (fc2_units, action_size), jnp.float32, -lim3, lim3)

    # PyTorch nn.Linear default bias init: U(-1/sqrt(in_features), 1/sqrt(in_features))
    b1 = jax.random.uniform(kb1, (1, fc1_units), jnp.float32,
                            -1.0 / math.sqrt(state_size), 1.0 / math.sqrt(state_size))
    b2 = jax.random.uniform(kb2, (1, fc2_units), jnp.float32,
                            -1.0 / math.sqrt(fc1_units), 1.0 / math.sqrt(fc1_units))
    b3 = jax.random.uniform(kb3, (1, action_size), jnp.float32,
                            -1.0 / math.sqrt(fc2_units), 1.0 / math.sqrt(fc2_units))
    return w1, b1, w2, b2, w3, b3


def _reference(state, w1, b1, w2, b2, w3, b3):
    return jnp.tanh(
        jnp.maximum(jnp.maximum(state @ w1 + b1, 0.0) @ w2 + b2, 0.0) @ w3 + b3
    )


if __name__ == "__main__":
    # Tennis environment-like sizes: state_size=24, action_size=2.
    key = jax.random.PRNGKey(0)
    kx, kx2, kp = jax.random.split(key, 3)

    state_size = 24
    action_size = 2
    params = init_actor_params(kp, state_size, action_size)

    # Small inference-style batch (single grid step).
    batch = 8
    state = jax.random.normal(kx, (batch, state_size), dtype=jnp.float32)
    out = actor_forward(state, *params)
    jax.block_until_ready(out)
    assert out.shape == (batch, action_size)
    assert jnp.allclose(out, _reference(state, *params), atol=1e-5, rtol=1e-5)

    # Replay-buffer-style batch that is not a tile multiple: exercises the
    # batch grid (multiple pipelined steps) and padded-row slicing.
    batch2 = 260
    state2 = jax.random.normal(kx2, (batch2, state_size), dtype=jnp.float32)
    out2 = actor_forward(state2, *params)
    jax.block_until_ready(out2)
    assert out2.shape == (batch2, action_size)
    assert jnp.allclose(out2, _reference(state2, *params), atol=1e-5, rtol=1e-5)

    print("KERNEL_OK")
</pallas_src>

<mosaic_0001>
module attributes {stable_mosaic.version = 11 : i64} {
  func.func @actor_kernel(%arg0: i32, %arg1: memref<8x128xf32, #tpu.memory_space<vmem>>, %arg2: memref<128x256xf32, #tpu.memory_space<vmem>>, %arg3: memref<1x256xf32, #tpu.memory_space<vmem>>, %arg4: memref<256x256xf32, #tpu.memory_space<vmem>>, %arg5: memref<1x256xf32, #tpu.memory_space<vmem>>, %arg6: memref<256x128xf32, #tpu.memory_space<vmem>>, %arg7: memref<1x128xf32, #tpu.memory_space<vmem>>, %arg8: memref<8x128xf32, #tpu.memory_space<vmem>>) attributes {dimension_semantics = [#tpu.dimension_semantics<parallel>], iteration_bounds = array<i64: 1>, scalar_prefetch = 0 : i64, scratch_operands = 0 : i64, tpu.core_type = #tpu.core_type<tc>, window_params = [{transform_indices = @transform_0, window_bounds = array<i64: 8, 128>}, {pipeline_mode = #tpu.pipeline_mode<synchronous>, transform_indices = @transform_1, window_bounds = array<i64: 128, 256>}, {pipeline_mode = #tpu.pipeline_mode<synchronous>, transform_indices = @transform_2, window_bounds = array<i64: 1, 256>}, {pipeline_mode = #tpu.pipeline_mode<synchronous>, transform_indices = @transform_3, window_bounds = array<i64: 256, 256>}, {pipeline_mode = #tpu.pipeline_mode<synchronous>, transform_indices = @transform_4, window_bounds = array<i64: 1, 256>}, {pipeline_mode = #tpu.pipeline_mode<synchronous>, transform_indices = @transform_5, window_bounds = array<i64: 256, 128>}, {pipeline_mode = #tpu.pipeline_mode<synchronous>, transform_indices = @transform_6, window_bounds = array<i64: 1, 128>}, {transform_indices = @transform_7, window_bounds = array<i64: 8, 128>}]} {
    %c0 = arith.constant 0 : index
    %c0_0 = arith.constant 0 : index
    %0 = vector.load %arg1[%c0, %c0_0] : memref<8x128xf32, #tpu.memory_space<vmem>>, vector<8x128xf32>
    %c0_1 = arith.constant 0 : index
    %c0_2 = arith.constant 0 : index
    %1 = vector.load %arg3[%c0_1, %c0_2] : memref<1x256xf32, #tpu.memory_space<vmem>>, vector<1x256xf32>
    %c0_3 = arith.constant 0 : index
    %c0_4 = arith.constant 0 : index
    %2 = vector.load %arg5[%c0_3, %c0_4] : memref<1x256xf32, #tpu.memory_space<vmem>>, vector<1x256xf32>
    %c0_5 = arith.constant 0 : index
    %c0_6 = arith.constant 0 : index
    %3 = vector.load %arg7[%c0_5, %c0_6] : memref<1x128xf32, #tpu.memory_space<vmem>>, vector<1x128xf32>
    %c0_7 = arith.constant 0 : index
    %c0_8 = arith.constant 0 : index
    %4 = vector.load %arg2[%c0_7, %c0_8] : memref<128x256xf32, #tpu.memory_space<vmem>>, vector<128x256xf32>
    %cst = arith.constant dense<0.000000e+00> : vector<8x256xf32>
    %5 = tpu.matmul %0, %4, %cst {dimension_numbers = #tpu.dot_dimension_numbers<[1], [0], [0], [1], [0, 0, 1, 1], [], []>} : vector<8x128xf32>, vector<128x256xf32>, vector<8x256xf32> -> vector<8x256xf32>
    %6 = vector.broadcast %1 : vector<1x256xf32> to vector<8x256xf32>
    %7 = arith.addf %5, %6 : vector<8x256xf32>
    %cst_9 = arith.constant 0.000000e+00 : f32
    %8 = vector.broadcast %cst_9 : f32 to vector<8x256xf32>
    %9 = arith.maximumf %7, %8 : vector<8x256xf32>
    %c0_10 = arith.constant 0 : index
    %c0_11 = arith.constant 0 : index
    %10 = vector.load %arg4[%c0_10, %c0_11] : memref<256x256xf32, #tpu.memory_space<vmem>>, vector<256x256xf32>
    %cst_12 = arith.constant dense<0.000000e+00> : vector<8x256xf32>
    %11 = tpu.matmul %9, %10, %cst_12 {dimension_numbers = #tpu.dot_dimension_numbers<[1], [0], [0], [1], [0, 0, 1, 1], [], []>} : vector<8x256xf32>, vector<256x256xf32>, vector<8x256xf32> -> vector<8x256xf32>
    %12 = vector.broadcast %2 : vector<1x256xf32> to vector<8x256xf32>
    %13 = arith.addf %11, %12 : vector<8x256xf32>
    %cst_13 = arith.constant 0.000000e+00 : f32
    %14 = vector.broadcast %cst_13 : f32 to vector<8x256xf32>
    %15 = arith.maximumf %13, %14 : vector<8x256xf32>
    %c0_14 = arith.constant 0 : index
    %c0_15 = arith.constant 0 : index
    %16 = vector.load %arg6[%c0_14, %c0_15] : memref<256x128xf32, #tpu.memory_space<vmem>>, vector<256x128xf32>
    %cst_16 = arith.constant dense<0.000000e+00> : vector<8x128xf32>
    %17 = tpu.matmul %15, %16, %cst_16 {dimension_numbers = #tpu.dot_dimension_numbers<[1], [0], [0], [1], [0, 0, 1, 1], [], []>} : vector<8x256xf32>, vector<256x128xf32>, vector<8x128xf32> -> vector<8x128xf32>
    %18 = vector.broadcast %3 : vector<1x128xf32> to vector<8x128xf32>
    %19 = arith.addf %17, %18 : vector<8x128xf32>
    %20 = math.tanh %19 : vector<8x128xf32>
    %c0_17 = arith.constant 0 : index
    %c0_18 = arith.constant 0 : index
    %21 = vector.load %arg8[%c0_17, %c0_18] : memref<8x128xf32, #tpu.memory_space<vmem>>, vector<8x128xf32>
    tpu.vector_store %arg8[%c0_17, %c0_18], %20 {strides = array<i32>} : memref<8x128xf32, #tpu.memory_space<vmem>>, vector<8x128xf32>,
    return
  }
  func.func @transform_0(%arg0: i32) -> (i32, i32) {
    %c0_i32 = arith.constant 0 : i32
    %c0_i32_0 = arith.constant 0 : i32
    return %arg0, %c0_i32 : i32, i32
  }
  func.func @transform_1(%arg0: i32) -> (i32, i32) {
    %c0_i32 = arith.constant 0 : i32
    %c0_i32_0 = arith.constant 0 : i32
    %c0_i32_1 = arith.constant 0 : i32
    return %c0_i32, %c0_i32_0 : i32, i32
  }
  func.func @transform_2(%arg0: i32) -> (i32, i32) {
    %c0_i32 = arith.constant 0 : i32
    %c0_i32_0 = arith.constant 0 : i32
    %c0_i32_1 = arith.constant 0 : i32
    return %c0_i32, %c0_i32_0 : i32, i32
  }
  func.func @transform_3(%arg0: i32) -> (i32, i32) {
    %c0_i32 = arith.constant 0 : i32
    %c0_i32_0 = arith.constant 0 : i32
    %c0_i32_1 = arith.constant 0 : i32
    return %c0_i32, %c0_i32_0 : i32, i32
  }
  func.func @transform_4(%arg0: i32) -> (i32, i32) {
    %c0_i32 = arith.constant 0 : i32
    %c0_i32_0 = arith.constant 0 : i32
    %c0_i32_1 = arith.constant 0 : i32
    return %c0_i32, %c0_i32_0 : i32, i32
  }
  func.func @transform_5(%arg0: i32) -> (i32, i32) {
    %c0_i32 = arith.constant 0 : i32
    %c0_i32_0 = arith.constant 0 : i32
    %c0_i32_1 = arith.constant 0 : i32
    return %c0_i32, %c0_i32_0 : i32, i32
  }
  func.func @transform_6(%arg0: i32) -> (i32, i32) {
    %c0_i32 = arith.constant 0 : i32
    %c0_i32_0 = arith.constant 0 : i32
    %c0_i32_1 = arith.constant 0 : i32
    return %c0_i32, %c0_i32_0 : i32, i32
  }
  func.func @transform_7(%arg0: i32) -> (i32, i32) {
    %c0_i32 = arith.constant 0 : i32
    %c0_i32_0 = arith.constant 0 : i32
    return %arg0, %c0_i32 : i32, i32
  }
}

</mosaic_0001>

<llo_original>
// kernel: tpu_custom_call.1
$region0: #{tpu_custom_call.1}
  #allocation0 [shape = 'u32[]', space=smem, size = 0x4, offset = 0x4, fixed_abs, tag = 'smem constant byte address 0x4 - core index']
  #allocation1 [shape = 'u32[144,128]{1,0:T(1,128)}', space=vmem, size = 0x12000, scoped, tag = 'internal scratch']
  %s0 = inlined_call_operand.hbm [shape: f32[8,128], index: 0, kind: input, shape index: {}]
  %s1 = inlined_call_operand.hbm [shape: f32[128,256], index: 1, kind: input, shape index: {}]
  %s2 = inlined_call_operand.vmem [shape: f32[1,256], index: 2, kind: input, shape index: {}]
  %s3 = inlined_call_operand.hbm [shape: f32[256,256], index: 3, kind: input, shape index: {}]
  %s4 = inlined_call_operand.vmem [shape: f32[1,256], index: 4, kind: input, shape index: {}]
  %s5 = inlined_call_operand.hbm [shape: f32[256,128], index: 5, kind: input, shape index: {}]
  %s6 = inlined_call_operand.vmem [shape: f32[1,128], index: 6, kind: input, shape index: {}]
  %s7 = inlined_call_operand.hbm [shape: f32[8,128], index: 7, kind: output, shape index: {}]
  %s8 = sld [smem:[#allocation0]]
  $region54: #{tpu_custom_call.1} parent=0
    _
  %s10 = ssub.s32 1, %s8
  %s11 = scalar_select 0, %s10, %s8
  $region1: #{tpu_custom_call.1} parent=0
    #allocation2 [shape = 'u8[4096]{0}', space=vmem, size = 0x1000, scoped, tag = 'input window, operand 0, single buffered']
    #allocation3 [shape = 's32[1]{0}', space=sflag, size = 0x4, scoped, tag = 'scoped memory for tpu_custom_call.1']
    #allocation4 [shape = 's32[1]{0}', space=sflag, size = 0x4, scoped, tag = 'scoped memory for tpu_custom_call.1']
    #allocation5 [shape = 'u8[131072]{0}', space=vmem, size = 0x20000, scoped, tag = 'input window, operand 1, single buffered']
    #allocation6 [shape = 's32[1]{0}', space=sflag, size = 0x4, scoped, tag = 'scoped memory for tpu_custom_call.1']
    #allocation7 [shape = 'u8[262144]{0}', space=vmem, size = 0x40000, scoped, tag = 'input window, operand 3, single buffered']
    #allocation8 [shape = 'u8[131072]{0}', space=vmem, size = 0x20000, scoped, tag = 'input window, operand 5, single buffered']
    #allocation9 [shape = 's32[1]{0}', space=sflag, size = 0x4, scoped, tag = 'scoped memory for tpu_custom_call.1']
    #allocation10 [shape = 'u8[4096]{0}', space=vmem, size = 0x1000, scoped, tag = 'output window, operand 0, single buffered']
    %12 = vsyncpa [#allocation3], 0
    %13 = vsyncpa [#allocation6], 0
    %14 = vsyncpa [#allocation9], 0
    %15 = vsyncpa [#allocation4], 0
    // Predicated region
    $region2: #{tpu_custom_call.1} parent=1 // pred_check
      _
    $region3: #{tpu_custom_call.1} parent=1 // pred_check_branch
      %17 = sbr.rel (0) target = $region5
    $region4: #{tpu_custom_call.1} parent=1 // pred_region
      %s19 = ssub.s32 128, 128
      %20 = vsyncadd [#allocation3], %s19
      %s22 = sshll.u32 [#allocation2], 4
      %s23 = int_to_ptr.vmem [resolvable:$true] %s22
      %25 = dma.hbm_to_vmem [thread:$0]  %s0, 128, %s23, [#allocation3]
    $region5: #{tpu_custom_call.1} parent=1 // pred_fallthru
      _
    // Predicated region
    $region6: #{tpu_custom_call.1} parent=1 // pred_check
      _
    $region7: #{tpu_custom_call.1} parent=1 // pred_check_branch
      %27 = sbr.rel (0) target = $region9
    $region8: #{tpu_custom_call.1} parent=1 // pred_region
      %s29 = ssub.s32 4096, 4096
      %30 = vsyncadd [#allocation6], %s29
      %s31 = sshll.u32 [#allocation5], 4
      %s32 = int_to_ptr.vmem [resolvable:$true] %s31
      %37 = dma.hbm_to_vmem [thread:$0]  %s1, 4096, %s32, [#allocation6], 256, 256, 16
    $region9: #{tpu_custom_call.1} parent=1 // pred_fallthru
      _
    // Predicated region
    $region10: #{tpu_custom_call.1} parent=1 // pred_check
      _
    $region11: #{tpu_custom_call.1} parent=1 // pred_check_branch
      %39 = sbr.rel (0) target = $region13
    $region12: #{tpu_custom_call.1} parent=1 // pred_region
      _
    $region13: #{tpu_custom_call.1} parent=1 // pred_fallthru
      _
    // Predicated region
    $region14: #{tpu_custom_call.1} parent=1 // pred_check
      _
    $region15: #{tpu_custom_call.1} parent=1 // pred_check_branch
      %41 = sbr.rel (0) target = $region17
    $region16: #{tpu_custom_call.1} parent=1 // pred_region
      %s43 = ssub.s32 8192, 8192
      %44 = vsyncadd [#allocation6], %s43
      %s45 = sshll.u32 [#allocation7], 4
      %s46 = int_to_ptr.vmem [resolvable:$true] %s45
      %51 = dma.hbm_to_vmem [thread:$0]  %s3, 8192, %s46, [#allocation6], 256, 256, 16
    $region17: #{tpu_custom_call.1} parent=1 // pred_fallthru
      _
    // Predicated region
    $region18: #{tpu_custom_call.1} parent=1 // pred_check
      _
    $region19: #{tpu_custom_call.1} parent=1 // pred_check_branch
      %53 = sbr.rel (0) target = $region21
    $region20: #{tpu_custom_call.1} parent=1 // pred_region
      _
    $region21: #{tpu_custom_call.1} parent=1 // pred_fallthru
      _
    // Predicated region
    $region22: #{tpu_custom_call.1} parent=1 // pred_check
      _
    $region23: #{tpu_custom_call.1} parent=1 // pred_check_branch
      %55 = sbr.rel (0) target = $region25
    $region24: #{tpu_custom_call.1} parent=1 // pred_region
      %s57 = ssub.s32 4096, 4096
      %58 = vsyncadd [#allocation9], %s57
      %s59 = sshll.u32 [#allocation8], 4
      %s60 = int_to_ptr.vmem [resolvable:$true] %s59
      %65 = dma.hbm_to_vmem [thread:$0]  %s5, 4096, %s60, [#allocation9], 128, 128, 8
    $region25: #{tpu_custom_call.1} parent=1 // pred_fallthru
      _
    // Predicated region
    $region26: #{tpu_custom_call.1} parent=1 // pred_check
      _
    $region27: #{tpu_custom_call.1} parent=1 // pred_check_branch
      %67 = sbr.rel (0) target = $region29
    $region28: #{tpu_custom_call.1} parent=1 // pred_region
      _
    $region29: #{tpu_custom_call.1} parent=1 // pred_fallthru
      _
    // Predicated region
    $region30: #{tpu_custom_call.1} parent=1 // pred_check
      _
    $region31: #{tpu_custom_call.1} parent=1 // pred_check_branch
      %69 = sbr.rel (0) target = $region33
    $region32: #{tpu_custom_call.1} parent=1 // pred_region
      %70 = dma.done [#allocation3], 128
    $region33: #{tpu_custom_call.1} parent=1 // pred_fallthru
      _
    // Predicated region
    $region34: #{tpu_custom_call.1} parent=1 // pred_check
      _
    $region35: #{tpu_custom_call.1} parent=1 // pred_check_branch
      %72 = sbr.rel (0) target = $region37
    $region36: #{tpu_custom_call.1} parent=1 // pred_region
      %73 = dma.done [#allocation6], 4096
    $region37: #{tpu_custom_call.1} parent=1 // pred_fallthru
      _
    // Predicated region
    $region38: #{tpu_custom_call.1} parent=1 // pred_check
      _
    $region39: #{tpu_custom_call.1} parent=1 // pred_check_branch
      %75 = sbr.rel (0) target = $region41
    $region40: #{tpu_custom_call.1} parent=1 // pred_region
      %76 = dma.done [#allocation6], 8192
    $region41: #{tpu_custom_call.1} parent=1 // pred_fallthru
      _
    // Predicated region
    $region42: #{tpu_custom_call.1} parent=1 // pred_check
      _
    $region43: #{tpu_custom_call.1} parent=1 // pred_check_branch
      %78 = sbr.rel (0) target = $region45
    $region44: #{tpu_custom_call.1} parent=1 // pred_region
      %79 = dma.done [#allocation9], 4096
    $region45: #{tpu_custom_call.1} parent=1 // pred_fallthru
      _
    %v80 = vld [vmem:[#allocation2] sm:$0xff]
    %v81 = vld [vmem:[%s2] sm:$0x3]
    %v82 = vld [vmem:[%s4] sm:$0x3]
    %v83 = vld [vmem:[%s6] sm:$0x1]
    %v84 = vld [vmem:[#allocation5] sm:$0xff]
    %v85 = vld [vmem:[#allocation5 + $0x8] sm:$0xff]
    %v86 = vld [vmem:[#allocation5 + $0x10] sm:$0xff]
    %v87 = vld [vmem:[#allocation5 + $0x18] sm:$0xff]
    %v88 = vld [vmem:[#allocation5 + $0x20] sm:$0xff]
    %v89 = vld [vmem:[#allocation5 + $0x28] sm:$0xff]
    %v90 = vld [vmem:[#allocation5 + $0x30] sm:$0xff]
    %v91 = vld [vmem:[#allocation5 + $0x38] sm:$0xff]
    %v92 = vld [vmem:[#allocation5 + $0x40] sm:$0xff]
    %v93 = vld [vmem:[#allocation5 + $0x48] sm:$0xff]
    %v94 = vld [vmem:[#allocation5 + $0x50] sm:$0xff]
    %v95 = vld [vmem:[#allocation5 + $0x58] sm:$0xff]
    %v96 = vld [vmem:[#allocation5 + $0x60] sm:$0xff]
    %v97 = vld [vmem:[#allocation5 + $0x68] sm:$0xff]
    %v98 = vld [vmem:[#allocation5 + $0x70] sm:$0xff]
    %v99 = vld [vmem:[#allocation5 + $0x78] sm:$0xff]
    %v100 = vld [vmem:[#allocation5 + $0x80] sm:$0xff]
    %v101 = vld [vmem:[#allocation5 + $0x88] sm:$0xff]
    %v102 = vld [vmem:[#allocation5 + $0x90] sm:$0xff]
    %v103 = vld [vmem:[#allocation5 + $0x98] sm:$0xff]
    %v104 = vld [vmem:[#allocation5 + $0xa0] sm:$0xff]
    %v105 = vld [vmem:[#allocation5 + $0xa8] sm:$0xff]
    %v106 = vld [vmem:[#allocation5 + $0xb0] sm:$0xff]
    %v107 = vld [vmem:[#allocation5 + $0xb8] sm:$0xff]
    %v108 = vld [vmem:[#allocation5 + $0xc0] sm:$0xff]
    %v109 = vld [vmem:[#allocation5 + $0xc8] sm:$0xff]
    %v110 = vld [vmem:[#allocation5 + $0xd0] sm:$0xff]
    %v111 = vld [vmem:[#allocation5 + $0xd8] sm:$0xff]
    %v112 = vld [vmem:[#allocation5 + $0xe0] sm:$0xff]
    %v113 = vld [vmem:[#allocation5 + $0xe8] sm:$0xff]
    %v114 = vld [vmem:[#allocation5 + $0xf0] sm:$0xff]
    %v115 = vld [vmem:[#allocation5 + $0xf8] sm:$0xff]
    %v117 = vlaneseq
    %v118 = vshrl.u32 %v117, 7
    %v119 = vsub.s32 0, %v118
    %v120 = vrot.slane %v81, %v119
    %v121 = vlaneseq
    %v122 = vshrl.u32 %v121, 7
    %v123 = vsub.s32 1, %v122
    %v124 = vrot.slane %v81, %v123
    %127 = vmatprep.subr.mxu0 %v85
    %128 = vmatpush1.msra.mxu0 %v84
    %129 = vmatprep.subr.mxu0 %v87
    %130 = vmatpush1.msra.mxu0 %v86
    %131 = vmatprep.subr.mxu0 %v89
    %132 = vmatpush1.msra.mxu0 %v88
    %133 = vmatprep.subr.mxu0 %v91
    %134 = vmatpush1.msra.mxu0 %v90
    %135 = vmatprep.subr.mxu0 %v93
    %136 = vmatpush1.msra.mxu0 %v92
    %137 = vmatprep.subr.mxu0 %v95
    %138 = vmatpush1.msra.mxu0 %v94
    %139 = vmatprep.subr.mxu0 %v97
    %140 = vmatpush1.msra.mxu0 %v96
    %141 = vmatprep.subr.mxu0 %v99
    %142 = vmatpush1.msra.mxu0 %v98
    %143 = vmatprep.subr.mxu0 %v101
    %144 = vmatpush1.msra.mxu0 %v100
    %145 = vmatprep.subr.mxu0 %v103
    %146 = vmatpush1.msra.mxu0 %v102
    %147 = vmatprep.subr.mxu0 %v105
    %148 = vmatpush1.msra.mxu0 %v104
    %149 = vmatprep.subr.mxu0 %v107
    %150 = vmatpush1.msra.mxu0 %v106
    %151 = vmatprep.subr.mxu0 %v109
    %152 = vmatpush1.msra.mxu0 %v108
    %153 = vmatprep.subr.mxu0 %v111
    %154 = vmatpush1.msra.mxu0 %v110
    %155 = vmatprep.subr.mxu0 %v113
    %156 = vmatpush1.msra.mxu0 %v112
    %157 = vmatprep.subr.mxu0 %v115
    %158 = vmatpush1.msra.mxu0 %v114
    %159 = vmatprep.subr.mxu0 0.0
    %160 = vmatpush1.msra.mxu0 0.0
    %161 = vmatprep.subr.mxu0 0.0
    %162 = vmatpush1.msra.mxu0 0.0
    %163 = vmatprep.subr.mxu0 0.0
    %164 = vmatpush1.msra.mxu0 0.0
    %165 = vmatprep.subr.mxu0 0.0
    %166 = vmatpush1.msra.mxu0 0.0
    %167 = vmatprep.subr.mxu0 0.0
    %168 = vmatpush1.msra.mxu0 0.0
    %169 = vmatprep.subr.mxu0 0.0
    %170 = vmatpush1.msra.mxu0 0.0
    %171 = vmatprep.subr.mxu0 0.0
    %172 = vmatpush1.msra.mxu0 0.0
    %173 = vmatprep.subr.mxu0 0.0
    %174 = vmatpush1.msra.mxu0 0.0
    %175 = vmatprep.subr.mxu0 0.0
    %176 = vmatpush1.msra.mxu0 0.0
    %177 = vmatprep.subr.mxu0 0.0
    %178 = vmatpush1.msra.mxu0 0.0
    %179 = vmatprep.subr.mxu0 0.0
    %180 = vmatpush1.msra.mxu0 0.0
    %181 = vmatprep.subr.mxu0 0.0
    %182 = vmatpush1.msra.mxu0 0.0
    %183 = vmatprep.subr.mxu0 0.0
    %184 = vmatpush1.msra.mxu0 0.0
    %185 = vmatprep.subr.mxu0 0.0
    %186 = vmatpush1.msra.mxu0 0.0
    %187 = vmatprep.subr.mxu0 0.0
    %188 = vmatpush1.msra.mxu0 0.0
    %189 = vmatprep.subr.mxu0 0.0
    %190 = vmatpush1.msra.mxu0 0.0
    %191 = vmatprep.mubr.f32.mxu0 0.0
    %192 = vmatmul.mubr.f32.gmra.mrb[0].mxu0 %v80
    %v193 = vpop.f32.mrb[0].mxu0
    %v194 = vadd.f32 %v120, %v193
    %v195 = vpop.f32.mrb[0].mxu0
    %v196 = vadd.f32 %v124, %v195
    %197 = vdwg.mxu0
    %v198 = vmax.f32 %v194, 0.0
    %v199 = vmax.f32 %v196, 0.0
    %v200 = vld [vmem:[#allocation7] sm:$0xff]
    %v201 = vld [vmem:[#allocation7 + $0x8] sm:$0xff]
    %v202 = vld [vmem:[#allocation7 + $0x10] sm:$0xff]
    %v203 = vld [vmem:[#allocation7 + $0x18] sm:$0xff]
    %v204 = vld [vmem:[#allocation7 + $0x20] sm:$0xff]
    %v205 = vld [vmem:[#allocation7 + $0x28] sm:$0xff]
    %v206 = vld [vmem:[#allocation7 + $0x30] sm:$0xff]
    %v207 = vld [vmem:[#allocation7 + $0x38] sm:$0xff]
    %v208 = vld [vmem:[#allocation7 + $0x40] sm:$0xff]
    %v209 = vld [vmem:[#allocation7 + $0x48] sm:$0xff]
    %v210 = vld [vmem:[#allocation7 + $0x50] sm:$0xff]
    %v211 = vld [vmem:[#allocation7 + $0x58] sm:$0xff]
    %v212 = vld [vmem:[#allocation7 + $0x60] sm:$0xff]
    %v213 = vld [vmem:[#allocation7 + $0x68] sm:$0xff]
    %v214 = vld [vmem:[#allocation7 + $0x70] sm:$0xff]
    %v215 = vld [vmem:[#allocation7 + $0x78] sm:$0xff]
    %v216 = vld [vmem:[#allocation7 + $0x80] sm:$0xff]
    %v217 = vld [vmem:[#allocation7 + $0x88] sm:$0xff]
    %v218 = vld [vmem:[#allocation7 + $0x90] sm:$0xff]
    %v219 = vld [vmem:[#allocation7 + $0x98] sm:$0xff]
    %v220 = vld [vmem:[#allocation7 + $0xa0] sm:$0xff]
    %v221 = vld [vmem:[#allocation7 + $0xa8] sm:$0xff]
    %v222 = vld [vmem:[#allocation7 + $0xb0] sm:$0xff]
    %v223 = vld [vmem:[#allocation7 + $0xb8] sm:$0xff]
    %v224 = vld [vmem:[#allocation7 + $0xc0] sm:$0xff]
    %v225 = vld [vmem:[#allocation7 + $0xc8] sm:$0xff]
    %v226 = vld [vmem:[#allocation7 + $0xd0] sm:$0xff]
    %v227 = vld [vmem:[#allocation7 + $0xd8] sm:$0xff]
    %v228 = vld [vmem:[#allocation7 + $0xe0] sm:$0xff]
    %v229 = vld [vmem:[#allocation7 + $0xe8] sm:$0xff]
    %v230 = vld [vmem:[#allocation7 + $0xf0] sm:$0xff]
    %v231 = vld [vmem:[#allocation7 + $0xf8] sm:$0xff]
    %v232 = vld [vmem:[#allocation7 + $0x100] sm:$0xff]
    %v233 = vld [vmem:[#allocation7 + $0x108] sm:$0xff]
    %v234 = vld [vmem:[#allocation7 + $0x110] sm:$0xff]
    %v235 = vld [vmem:[#allocation7 + $0x118] sm:$0xff]
    %v236 = vld [vmem:[#allocation7 + $0x120] sm:$0xff]
    %v237 = vld [vmem:[#allocation7 + $0x128] sm:$0xff]
    %v238 = vld [vmem:[#allocation7 + $0x130] sm:$0xff]
    %v239 = vld [vmem:[#allocation7 + $0x138] sm:$0xff]
    %v240 = vld [vmem:[#allocation7 + $0x140] sm:$0xff]
    %v241 = vld [vmem:[#allocation7 + $0x148] sm:$0xff]
    %v242 = vld [vmem:[#allocation7 + $0x150] sm:$0xff]
    %v243 = vld [vmem:[#allocation7 + $0x158] sm:$0xff]
    %v244 = vld [vmem:[#allocation7 + $0x160] sm:$0xff]
    %v245 = vld [vmem:[#allocation7 + $0x168] sm:$0xff]
    %v246 = vld [vmem:[#allocation7 + $0x170] sm:$0xff]
    %v247 = vld [vmem:[#allocation7 + $0x178] sm:$0xff]
    %v248 = vld [vmem:[#allocation7 + $0x180] sm:$0xff]
    %v249 = vld [vmem:[#allocation7 + $0x188] sm:$0xff]
    %v250 = vld [vmem:[#allocation7 + $0x190] sm:$0xff]
    %v251 = vld [vmem:[#allocation7 + $0x198] sm:$0xff]
    %v252 = vld [vmem:[#allocation7 + $0x1a0] sm:$0xff]
    %v253 = vld [vmem:[#allocation7 + $0x1a8] sm:$0xff]
    %v254 = vld [vmem:[#allocation7 + $0x1b0] sm:$0xff]
    %v255 = vld [vmem:[#allocation7 + $0x1b8] sm:$0xff]
    %v256 = vld [vmem:[#allocation7 + $0x1c0] sm:$0xff]
    %v257 = vld [vmem:[#allocation7 + $0x1c8] sm:$0xff]
    %v258 = vld [vmem:[#allocation7 + $0x1d0] sm:$0xff]
    %v259 = vld [vmem:[#allocation7 + $0x1d8] sm:$0xff]
    %v260 = vld [vmem:[#allocation7 + $0x1e0] sm:$0xff]
    %v261 = vld [vmem:[#allocation7 + $0x1e8] sm:$0xff]
    %v262 = vld [vmem:[#allocation7 + $0x1f0] sm:$0xff]
    %v263 = vld [vmem:[#allocation7 + $0x1f8] sm:$0xff]
    %v265 = vlaneseq
    %v266 = vshrl.u32 %v265, 7
    %v267 = vsub.s32 0, %v266
    %v268 = vrot.slane %v82, %v267
    %v269 = vlaneseq
    %v270 = vshrl.u32 %v269, 7
    %v271 = vsub.s32 1, %v270
    %v272 = vrot.slane %v82, %v271
    %275 = vmatprep.subr.mxu0 %v201
    %276 = vmatpush1.msra.mxu0 %v200
    %277 = vmatprep.subr.mxu0 %v203
    %278 = vmatpush1.msra.mxu0 %v202
    %279 = vmatprep.subr.mxu0 %v205
    %280 = vmatpush1.msra.mxu0 %v204
    %281 = vmatprep.subr.mxu0 %v207
    %282 = vmatpush1.msra.mxu0 %v206
    %283 = vmatprep.subr.mxu0 %v209
    %284 = vmatpush1.msra.mxu0 %v208
    %285 = vmatprep.subr.mxu0 %v211
    %286 = vmatpush1.msra.mxu0 %v210
    %287 = vmatprep.subr.mxu0 %v213
    %288 = vmatpush1.msra.mxu0 %v212
    %289 = vmatprep.subr.mxu0 %v215
    %290 = vmatpush1.msra.mxu0 %v214
    %291 = vmatprep.subr.mxu0 %v217
    %292 = vmatpush1.msra.mxu0 %v216
    %293 = vmatprep.subr.mxu0 %v219
    %294 = vmatpush1.msra.mxu0 %v218
    %295 = vmatprep.subr.mxu0 %v221
    %296 = vmatpush1.msra.mxu0 %v220
    %297 = vmatprep.subr.mxu0 %v223
    %298 = vmatpush1.msra.mxu0 %v222
    %299 = vmatprep.subr.mxu0 %v225
    %300 = vmatpush1.msra.mxu0 %v224
    %301 = vmatprep.subr.mxu0 %v227
    %302 = vmatpush1.msra.mxu0 %v226
    %303 = vmatprep.subr.mxu0 %v229
    %304 = vmatpush1.msra.mxu0 %v228
    %305 = vmatprep.subr.mxu0 %v231
    %306 = vmatpush1.msra.mxu0 %v230
    %307 = vmatprep.subr.mxu0 %v233
    %308 = vmatpush1.msra.mxu0 %v232
    %309 = vmatprep.subr.mxu0 %v235
    %310 = vmatpush1.msra.mxu0 %v234
    %311 = vmatprep.subr.mxu0 %v237
    %312 = vmatpush1.msra.mxu0 %v236
    %313 = vmatprep.subr.mxu0 %v239
    %314 = vmatpush1.msra.mxu0 %v238
    %315 = vmatprep.subr.mxu0 %v241
    %316 = vmatpush1.msra.mxu0 %v240
    %317 = vmatprep.subr.mxu0 %v243
    %318 = vmatpush1.msra.mxu0 %v242
    %319 = vmatprep.subr.mxu0 %v245
    %320 = vmatpush1.msra.mxu0 %v244
    %321 = vmatprep.subr.mxu0 %v247
    %322 = vmatpush1.msra.mxu0 %v246
    %323 = vmatprep.subr.mxu0 %v249
    %324 = vmatpush1.msra.mxu0 %v248
    %325 = vmatprep.subr.mxu0 %v251
    %326 = vmatpush1.msra.mxu0 %v250
    %327 = vmatprep.subr.mxu0 %v253
    %328 = vmatpush1.msra.mxu0 %v252
    %329 = vmatprep.subr.mxu0 %v255
    %330 = vmatpush1.msra.mxu0 %v254
    %331 = vmatprep.subr.mxu0 %v257
    %332 = vmatpush1.msra.mxu0 %v256
    %333 = vmatprep.subr.mxu0 %v259
    %334 = vmatpush1.msra.mxu0 %v258
    %335 = vmatprep.subr.mxu0 %v261
    %336 = vmatpush1.msra.mxu0 %v260
    %337 = vmatprep.subr.mxu0 %v263
    %338 = vmatpush1.msra.mxu0 %v262
    %339 = vmatprep.mubr.f32.mxu0 %v199
    %340 = vmatmul.mubr.f32.gmra.mrb[0].mxu0 %v198
    %v341 = vpop.f32.mrb[0].mxu0
    %v342 = vadd.f32 %v268, %v341
    %v343 = vpop.f32.mrb[0].mxu0
    %v344 = vadd.f32 %v272, %v343
    %345 = vdwg.mxu0
    %v346 = vmax.f32 %v342, 0.0
    %v347 = vmax.f32 %v344, 0.0
    %v348 = vld [vmem:[#allocation8] sm:$0xff]
    %v349 = vld [vmem:[#allocation8 + $0x8] sm:$0xff]
    %v350 = vld [vmem:[#allocation8 + $0x10] sm:$0xff]
    %v351 = vld [vmem:[#allocation8 + $0x18] sm:$0xff]
    %v352 = vld [vmem:[#allocation8 + $0x20] sm:$0xff]
    %v353 = vld [vmem:[#allocation8 + $0x28] sm:$0xff]
    %v354 = vld [vmem:[#allocation8 + $0x30] sm:$0xff]
    %v355 = vld [vmem:[#allocation8 + $0x38] sm:$0xff]
    %v356 = vld [vmem:[#allocation8 + $0x40] sm:$0xff]
    %v357 = vld [vmem:[#allocation8 + $0x48] sm:$0xff]
    %v358 = vld [vmem:[#allocation8 + $0x50] sm:$0xff]
    %v359 = vld [vmem:[#allocation8 + $0x58] sm:$0xff]
    %v360 = vld [vmem:[#allocation8 + $0x60] sm:$0xff]
    %v361 = vld [vmem:[#allocation8 + $0x68] sm:$0xff]
    %v362 = vld [vmem:[#allocation8 + $0x70] sm:$0xff]
    %v363 = vld [vmem:[#allocation8 + $0x78] sm:$0xff]
    %v364 = vld [vmem:[#allocation8 + $0x80] sm:$0xff]
    %v365 = vld [vmem:[#allocation8 + $0x88] sm:$0xff]
    %v366 = vld [vmem:[#allocation8 + $0x90] sm:$0xff]
    %v367 = vld [vmem:[#allocation8 + $0x98] sm:$0xff]
    %v368 = vld [vmem:[#allocation8 + $0xa0] sm:$0xff]
    %v369 = vld [vmem:[#allocation8 + $0xa8] sm:$0xff]
    %v370 = vld [vmem:[#allocation8 + $0xb0] sm:$0xff]
    %v371 = vld [vmem:[#allocation8 + $0xb8] sm:$0xff]
    %v372 = vld [vmem:[#allocation8 + $0xc0] sm:$0xff]
    %v373 = vld [vmem:[#allocation8 + $0xc8] sm:$0xff]
    %v374 = vld [vmem:[#allocation8 + $0xd0] sm:$0xff]
    %v375 = vld [vmem:[#allocation8 + $0xd8] sm:$0xff]
    %v376 = vld [vmem:[#allocation8 + $0xe0] sm:$0xff]
    %v377 = vld [vmem:[#allocation8 + $0xe8] sm:$0xff]
    %v378 = vld [vmem:[#allocation8 + $0xf0] sm:$0xff]
    %v379 = vld [vmem:[#allocation8 + $0xf8] sm:$0xff]
    %v381 = vlaneseq
    %v382 = vshrl.u32 %v381, 7
    %v383 = vsub.s32 0, %v382
    %v384 = vrot.slane %v83, %v383
    %386 = vmatprep.subr.mxu0 0.0
    %387 = vmatpush1.msra.mxu0 %v348
    %388 = vmatprep.subr.mxu0 0.0
    %389 = vmatpush1.msra.mxu0 %v349
    %390 = vmatprep.subr.mxu0 0.0
    %391 = vmatpush1.msra.mxu0 %v350
    %392 = vmatprep.subr.mxu0 0.0
    %393 = vmatpush1.msra.mxu0 %v351
    %394 = vmatprep.subr.mxu0 0.0
    %395 = vmatpush1.msra.mxu0 %v352
    %396 = vmatprep.subr.mxu0 0.0
    %397 = vmatpush1.msra.mxu0 %v353
    %398 = vmatprep.subr.mxu0 0.0
    %399 = vmatpush1.msra.mxu0 %v354
    %400 = vmatprep.subr.mxu0 0.0
    %401 = vmatpush1.msra.mxu0 %v355
    %402 = vmatprep.subr.mxu0 0.0
    %403 = vmatpush1.msra.mxu0 %v356
    %404 = vmatprep.subr.mxu0 0.0
    %405 = vmatpush1.msra.mxu0 %v357
    %406 = vmatprep.subr.mxu0 0.0
    %407 = vmatpush1.msra.mxu0 %v358
    %408 = vmatprep.subr.mxu0 0.0
    %409 = vmatpush1.msra.mxu0 %v359
    %410 = vmatprep.subr.mxu0 0.0
    %411 = vmatpush1.msra.mxu0 %v360
    %412 = vmatprep.subr.mxu0 0.0
    %413 = vmatpush1.msra.mxu0 %v361
    %414 = vmatprep.subr.mxu0 0.0
    %415 = vmatpush1.msra.mxu0 %v362
    %416 = vmatprep.subr.mxu0 0.0
    %417 = vmatpush1.msra.mxu0 %v363
    %418 = vmatprep.subr.mxu0 0.0
    %419 = vmatpush1.msra.mxu0 %v364
    %420 = vmatprep.subr.mxu0 0.0
    %421 = vmatpush1.msra.mxu0 %v365
    %422 = vmatprep.subr.mxu0 0.0
    %423 = vmatpush1.msra.mxu0 %v366
    %424 = vmatprep.subr.mxu0 0.0
    %425 = vmatpush1.msra.mxu0 %v367
    %426 = vmatprep.subr.mxu0 0.0
    %427 = vmatpush1.msra.mxu0 %v368
    %428 = vmatprep.subr.mxu0 0.0
    %429 = vmatpush1.msra.mxu0 %v369
    %430 = vmatprep.subr.mxu0 0.0
    %431 = vmatpush1.msra.mxu0 %v370
    %432 = vmatprep.subr.mxu0 0.0
    %433 = vmatpush1.msra.mxu0 %v371
    %434 = vmatprep.subr.mxu0 0.0
    %435 = vmatpush1.msra.mxu0 %v372
    %436 = vmatprep.subr.mxu0 0.0
    %437 = vmatpush1.msra.mxu0 %v373
    %438 = vmatprep.subr.mxu0 0.0
    %439 = vmatpush1.msra.mxu0 %v374
    %440 = vmatprep.subr.mxu0 0.0
    %441 = vmatpush1.msra.mxu0 %v375
    %442 = vmatprep.subr.mxu0 0.0
    %443 = vmatpush1.msra.mxu0 %v376
    %444 = vmatprep.subr.mxu0 0.0
    %445 = vmatpush1.msra.mxu0 %v377
    %446 = vmatprep.subr.mxu0 0.0
    %447 = vmatpush1.msra.mxu0 %v378
    %448 = vmatprep.subr.mxu0 0.0
    %449 = vmatpush1.msra.mxu0 %v379
    %450 = vmatprep.mubr.f32.mxu0 %v347
    %451 = vmatmul.mubr.f32.gmra.mrb[0].mxu0 %v346
    %v452 = vpop.f32.mrb[0].mxu0
    %v453 = vadd.f32 %v384, %v452
    %v454 = vpop.f32.mrb[0].mxu0
    %455 = vdwg.mxu0
    %v456 = vtanh.pop %v453
    %457 = vst [vmem:[#allocation10] sm:$0xff] %v456
    // Predicated region
    $region46: #{tpu_custom_call.1} parent=1 // pred_check
      _
    $region47: #{tpu_custom_call.1} parent=1 // pred_check_branch
      %459 = sbr.rel (0) target = $region49
    $region48: #{tpu_custom_call.1} parent=1 // pred_region
      %s461 = ssub.s32 128, 128
      %462 = vsyncadd [#allocation4], %s461
      %s464 = sshll.u32 [#allocation10], 4
      %s465 = int_to_ptr.vmem [resolvable:$true] %s464
      %467 = dma.vmem_to_hbm [thread:$0]  %s465, 128, %s7, [#allocation4]
    $region49: #{tpu_custom_call.1} parent=1 // pred_fallthru
      _
    // Predicated region
    $region50: #{tpu_custom_call.1} parent=1 // pred_check
      _
    $region51: #{tpu_custom_call.1} parent=1 // pred_check_branch
      %469 = sbr.rel (0) target = $region53
    $region52: #{tpu_custom_call.1} parent=1 // pred_region
      %470 = dma.done [#allocation4], 128
    $region53: #{tpu_custom_call.1} parent=1 // pred_fallthru
      _
    %471 = vsyncpa [#allocation3], 1
    %472 = vsyncpa [#allocation6], 1
    %473 = vsyncpa [#allocation9], 1
    %474 = vsyncpa [#allocation4], 1

</llo_original>
